<compile_context>
chip_gen: v7x
topology: tpu7x:2x2x1
jax: 0.10.0
libtpu: 0.0.40
codegen_flags: <defaults>
</compile_context>

<pallas_src>
import functools

import jax
import jax.numpy as jnp
from jax.experimental import pallas as pl
from jax.experimental.pallas import tpu as pltpu


# ----------------------------- Pallas kernel --------------------------------

def _logits_kernel(x_ref, w_ref, out_ref):
    """One (batch-tile, vocab-tile) block of logits = x_cat @ W_cat.

    x_ref   : [TB, K]   fused activations (K = 2*D), K resident
    w_ref   : [K, TN]   fused, pre-transposed vocab table tile (lane-dense)
    out_ref : [TB, TN]
    """
    out_ref[...] = jnp.dot(
        x_ref[...], w_ref[...],
        preferred_element_type=jnp.float32).astype(out_ref.dtype)


def _round_up(x, m):
    return ((x + m - 1) // m) * m


def attr_network_logits(x_cat, w_fused, *, tile_n=2048, tile_b=256,
                        vmem_budget_bytes=24 * 1024 * 1024,
                        out_dtype=jnp.float32):
    """logits = x_cat @ w_fused  with vocab (lane) axis tiled on a TPU grid.

    x_cat   : [B, K]  (K = 2*embed_size) fused user/item embeddings
    w_fused : [K, V]  fused, transposed vocab embedding tables
    """
    B, K = x_cat.shape
    Kw, V = w_fused.shape
    assert K == Kw, (K, Kw)

    in_itemsize = jnp.dtype(w_fused.dtype).itemsize
    out_itemsize = jnp.dtype(out_dtype).itemsize

    # --- batch tile: keep the whole batch resident unless it is large -------
    if B > tile_b:
        tb = tile_b
        Bp = _round_up(B, tb)
    else:
        tb = B
        Bp = B

    # --- vocab (lane) tile: as large as possible within the VMEM budget -----
    v128 = _round_up(V, 128)
    tn = min(_round_up(max(tile_n, 128), 128), v128)

    def _db_vmem_bytes(tn_):
        # double-buffered input block + weight tile + output block
        return 2 * (tb * K * in_itemsize
                    + K * tn_ * in_itemsize
                    + tb * tn_ * out_itemsize)

    while tn > 128 and _db_vmem_bytes(tn) > vmem_budget_bytes:
        tn //= 2
    tn = max(tn, 128)
    Vp = _round_up(v128, tn)

    # Zero-pad once; padded rows/cols produce zero logits and are sliced off.
    if Bp != B:
        x_cat = jnp.pad(x_cat, ((0, Bp - B), (0, 0)))
    if Vp != V:
        w_fused = jnp.pad(w_fused, ((0, 0), (0, Vp - V)))

    grid = (Bp // tb, Vp // tn)

    cost = pl.CostEstimate(
        flops=2 * Bp * K * Vp,
        transcendentals=0,
        bytes_accessed=(K * Vp * in_itemsize                 # weight stream
                        + Bp * K * in_itemsize * grid[1]     # x re-read per tile
                        + Bp * Vp * out_itemsize),           # logits writeback
    )

    out = pl.pallas_call(
        _logits_kernel,
        out_shape=jax.ShapeDtypeStruct((Bp, Vp), out_dtype),
        grid_spec=pltpu.PrefetchScalarGridSpec(
            num_scalar_prefetch=0,
            grid=grid,
            in_specs=[
                pl.BlockSpec((tb, K), lambda i, j: (i, 0)),   # fused activations
                pl.BlockSpec((K, tn), lambda i, j: (0, j)),   # lane-dense W tile
            ],
            out_specs=pl.BlockSpec((tb, tn), lambda i, j: (i, j)),
        ),
        compiler_params=pltpu.CompilerParams(
            dimension_semantics=("parallel", "parallel")),
        cost_estimate=cost,
    )(x_cat, w_fused)

    if Bp != B or Vp != V:
        out = out[:B, :V]
    return out


# ------------------------- Module (params + forward) ------------------------

def init_params(key, *, vocab_size, user_num, item_num, embed_size):
    """Deterministic uniform(-0.01, 0.01) init, matching f_init_weight."""
    initrange = 0.01
    ks = jax.random.split(key, 5)
    u = lambda k, shape: jax.random.uniform(
        k, shape, jnp.float32, minval=-initrange, maxval=initrange)
    return {
        "attr_user_embedding": u(ks[0], (vocab_size, embed_size)),
        "attr_item_embedding": u(ks[1], (vocab_size, embed_size)),
        "user_embedding": u(ks[2], (user_num, embed_size)),
        "item_embedding": u(ks[3], (item_num, embed_size)),
        "attr_embedding_x": u(ks[4], (vocab_size, embed_size)),
    }


def fuse_vocab_tables(voc_user_embed, voc_item_embed, dtype=None):
    """One-time (amortized) prep: concat along embed dim and transpose to [2D, V].

    Pass dtype=jnp.bfloat16 to halve HBM weight traffic (MXU still accumulates
    in f32 inside the kernel); kept f32 here to match reference numerics.
    """
    w = jnp.concatenate([voc_user_embed, voc_item_embed], axis=1).T   # [2D, V]
    if dtype is not None:
        w = w.astype(dtype)
    return w


@jax.jit
def forward(params, fused_vocab_weight, user_ids, item_ids, attr_ids, attr_len):
    # Embedding lookups (glue; gathers stay in plain JAX).
    user_embed = params["user_embedding"][user_ids]        # [B, D]
    item_embed = params["item_embedding"][item_ids]        # [B, D]
    _ = params["attr_embedding_x"][attr_ids]               # dead w.r.t. logits (DCE'd)
    _ = attr_len + 2                                       # mask length (dead w.r.t. logits)

    # Fused activations: [B, 2D], contraction dim matches fused weight [2D, V].
    x_cat = jnp.concatenate([user_embed, item_embed], axis=1)
    x_cat = x_cat.astype(fused_vocab_weight.dtype)

    # Hot path: single [B,2D] x [2D,V] matmul streamed over lane-dense vocab tiles.
    return attr_network_logits(x_cat, fused_vocab_weight)


# ----------------------------------- main ------------------------------------

if __name__ == "__main__":
    # Small, self-consistent sizes (attr/user/item embed sizes must be equal
    # for the matmuls in the original module to be well-formed).
    VOCAB_SIZE = 256
    USER_NUM = 16
    ITEM_NUM = 16
    EMBED = 32
    B = 8
    SEQ = 8

    key = jax.random.PRNGKey(0)
    k_params, k_u, k_i, k_a, k_l = jax.random.split(key, 5)

    params = init_params(k_params, vocab_size=VOCAB_SIZE, user_num=USER_NUM,
                         item_num=ITEM_NUM, embed_size=EMBED)

    # One-time weight prep (amortized across forward calls).
    fused_w = fuse_vocab_tables(params["attr_user_embedding"],
                                params["attr_item_embedding"])

    user_ids = jax.random.randint(k_u, (B,), 0, USER_NUM, dtype=jnp.int32)
    item_ids = jax.random.randint(k_i, (B,), 0, ITEM_NUM, dtype=jnp.int32)
    attr_ids = jax.random.randint(k_a, (B, SEQ), 0, VOCAB_SIZE, dtype=jnp.int32)
    attr_len = jax.random.randint(k_l, (B,), 1, SEQ + 1, dtype=jnp.int32)

    logits = forward(params, fused_w, user_ids, item_ids, attr_ids, attr_len)
    logits = jax.block_until_ready(logits)

    # Reference check against plain-JAX math.
    ue = params["user_embedding"][user_ids]
    ie = params["item_embedding"][item_ids]
    ref = ue @ params["attr_user_embedding"].T + ie @ params["attr_item_embedding"].T
    assert logits.shape == (B, VOCAB_SIZE)
    assert jnp.allclose(logits, ref, atol=1e-5, rtol=1e-5)

    print("KERNEL_OK")
</pallas_src>

<mosaic_0001>
module attributes {stable_mosaic.version = 11 : i64} {
  func.func @_logits_kernel(%arg0: i32, %arg1: i32, %arg2: memref<8x64xf32, #tpu.memory_space<vmem>>, %arg3: memref<64x256xf32, #tpu.memory_space<vmem>>, %arg4: memref<8x256xf32, #tpu.memory_space<vmem>>) attributes {dimension_semantics = [#tpu.dimension_semantics<parallel>, #tpu.dimension_semantics<parallel>], iteration_bounds = array<i64: 1, 1>, scalar_prefetch = 0 : i64, scratch_operands = 0 : i64, tpu.core_type = #tpu.core_type<tc>, window_params = [{transform_indices = @transform_0, window_bounds = array<i64: 8, 64>}, {transform_indices = @transform_1, window_bounds = array<i64: 64, 256>}, {transform_indices = @transform_2, window_bounds = array<i64: 8, 256>}]} {
    %c0 = arith.constant 0 : index
    %c0_0 = arith.constant 0 : index
    %0 = vector.load %arg2[%c0, %c0_0] : memref<8x64xf32, #tpu.memory_space<vmem>>, vector<8x64xf32>
    %c0_1 = arith.constant 0 : index
    %c0_2 = arith.constant 0 : index
    %1 = vector.load %arg3[%c0_1, %c0_2] : memref<64x256xf32, #tpu.memory_space<vmem>>, vector<64x256xf32>
    %cst = arith.constant dense<0.000000e+00> : vector<8x256xf32>
    %2 = tpu.matmul %0, %1, %cst {dimension_numbers = #tpu.dot_dimension_numbers<[1], [0], [0], [1], [0, 0, 1, 1], [], []>} : vector<8x64xf32>, vector<64x256xf32>, vector<8x256xf32> -> vector<8x256xf32>
    %c0_3 = arith.constant 0 : index
    %c0_4 = arith.constant 0 : index
    %3 = vector.load %arg4[%c0_3, %c0_4] : memref<8x256xf32, #tpu.memory_space<vmem>>, vector<8x256xf32>
    tpu.vector_store %arg4[%c0_3, %c0_4], %2 {strides = array<i32>} : memref<8x256xf32, #tpu.memory_space<vmem>>, vector<8x256xf32>,
    return
  }
  func.func @transform_0(%arg0: i32, %arg1: i32) -> (i32, i32) {
    %c0_i32 = arith.constant 0 : i32
    %c0_i32_0 = arith.constant 0 : i32
    return %arg0, %c0_i32 : i32, i32
  }
  func.func @transform_1(%arg0: i32, %arg1: i32) -> (i32, i32) {
    %c0_i32 = arith.constant 0 : i32
    %c0_i32_0 = arith.constant 0 : i32
    return %c0_i32, %arg1 : i32, i32
  }
  func.func @transform_2(%arg0: i32, %arg1: i32) -> (i32, i32) {
    %c0_i32 = arith.constant 0 : i32
    return %arg0, %arg1 : i32, i32
  }
}

</mosaic_0001>

<llo_original>
// kernel: forward.1
$region0: #{forward.1}
  #allocation0 [shape = 'u32[]', space=smem, size = 0x4, offset = 0x4, fixed_abs, tag = 'smem constant byte address 0x4 - core index']
  #allocation1 [shape = 'u32[144,128]{1,0:T(1,128)}', space=vmem, size = 0x12000, scoped, tag = 'internal scratch']
  %s0 = inlined_call_operand.vmem [shape: f32[8,64], index: 0, kind: input, shape index: {}]
  %s1 = inlined_call_operand.vmem [shape: f32[64,256], index: 1, kind: input, shape index: {}]
  %s2 = inlined_call_operand.hbm [shape: f32[8,256], index: 2, kind: output, shape index: {}]
  %s3 = sld [smem:[#allocation0]]
  $region18: #{forward.1} parent=0
    _
  %s5 = ssub.s32 1, %s3
  %s6 = scalar_select 0, %s5, %s3
  $region1: #{forward.1} parent=0
    #allocation2 [shape = 'u8[8192]{0}', space=vmem, size = 0x2000, scoped, tag = 'output window, operand 0, single buffered']
    #allocation3 [shape = 's32[1]{0}', space=sflag, size = 0x4, scoped, tag = 'scoped memory for forward.1']
    %7 = vsyncpa [#allocation3], 0
    // Predicated region
    $region2: #{forward.1} parent=1 // pred_check
      _
    $region3: #{forward.1} parent=1 // pred_check_branch
      %9 = sbr.rel (0) target = $region5
    $region4: #{forward.1} parent=1 // pred_region
      _
    $region5: #{forward.1} parent=1 // pred_fallthru
      _
    // Predicated region
    $region6: #{forward.1} parent=1 // pred_check
      _
    $region7: #{forward.1} parent=1 // pred_check_branch
      %11 = sbr.rel (0) target = $region9
    $region8: #{forward.1} parent=1 // pred_region
      _
    $region9: #{forward.1} parent=1 // pred_fallthru
      _
    %v12 = vld [vmem:[%s0] sm:$0xff]
    %v13 = vld [vmem:[%s1] sm:$0xff]
    %v14 = vld [vmem:[%s1 + $0x8] sm:$0xff]
    %v15 = vld [vmem:[%s1 + $0x10] sm:$0xff]
    %v16 = vld [vmem:[%s1 + $0x18] sm:$0xff]
    %v17 = vld [vmem:[%s1 + $0x20] sm:$0xff]
    %v18 = vld [vmem:[%s1 + $0x28] sm:$0xff]
    %v19 = vld [vmem:[%s1 + $0x30] sm:$0xff]
    %v20 = vld [vmem:[%s1 + $0x38] sm:$0xff]
    %v21 = vld [vmem:[%s1 + $0x40] sm:$0xff]
    %v22 = vld [vmem:[%s1 + $0x48] sm:$0xff]
    %v23 = vld [vmem:[%s1 + $0x50] sm:$0xff]
    %v24 = vld [vmem:[%s1 + $0x58] sm:$0xff]
    %v25 = vld [vmem:[%s1 + $0x60] sm:$0xff]
    %v26 = vld [vmem:[%s1 + $0x68] sm:$0xff]
    %v27 = vld [vmem:[%s1 + $0x70] sm:$0xff]
    %v28 = vld [vmem:[%s1 + $0x78] sm:$0xff]
    %vm29 = vcmask 523264
    %v31 = vsel %vm29, %v12, 0
    %33 = vmatprep.subr.mxu0 %v14
    %34 = vmatpush1.msra.mxu0 %v13
    %35 = vmatprep.subr.mxu0 %v16
    %36 = vmatpush1.msra.mxu0 %v15
    %37 = vmatprep.subr.mxu0 %v18
    %38 = vmatpush1.msra.mxu0 %v17
    %39 = vmatprep.subr.mxu0 %v20
    %40 = vmatpush1.msra.mxu0 %v19
    %41 = vmatprep.subr.mxu0 %v22
    %42 = vmatpush1.msra.mxu0 %v21
    %43 = vmatprep.subr.mxu0 %v24
    %44 = vmatpush1.msra.mxu0 %v23
    %45 = vmatprep.subr.mxu0 %v26
    %46 = vmatpush1.msra.mxu0 %v25
    %47 = vmatprep.subr.mxu0 %v28
    %48 = vmatpush1.msra.mxu0 %v27
    %49 = vmatprep.subr.mxu0 0.0
    %50 = vmatpush1.msra.mxu0 0.0
    %51 = vmatprep.subr.mxu0 0.0
    %52 = vmatpush1.msra.mxu0 0.0
    %53 = vmatprep.subr.mxu0 0.0
    %54 = vmatpush1.msra.mxu0 0.0
    %55 = vmatprep.subr.mxu0 0.0
    %56 = vmatpush1.msra.mxu0 0.0
    %57 = vmatprep.subr.mxu0 0.0
    %58 = vmatpush1.msra.mxu0 0.0
    %59 = vmatprep.subr.mxu0 0.0
    %60 = vmatpush1.msra.mxu0 0.0
    %61 = vmatprep.subr.mxu0 0.0
    %62 = vmatpush1.msra.mxu0 0.0
    %63 = vmatprep.subr.mxu0 0.0
    %64 = vmatpush1.msra.mxu0 0.0
    %65 = vmatprep.subr.mxu0 0.0
    %66 = vmatpush1.msra.mxu0 0.0
    %67 = vmatprep.subr.mxu0 0.0
    %68 = vmatpush1.msra.mxu0 0.0
    %69 = vmatprep.subr.mxu0 0.0
    %70 = vmatpush1.msra.mxu0 0.0
    %71 = vmatprep.subr.mxu0 0.0
    %72 = vmatpush1.msra.mxu0 0.0
    %73 = vmatprep.subr.mxu0 0.0
    %74 = vmatpush1.msra.mxu0 0.0
    %75 = vmatprep.subr.mxu0 0.0
    %76 = vmatpush1.msra.mxu0 0.0
    %77 = vmatprep.subr.mxu0 0.0
    %78 = vmatpush1.msra.mxu0 0.0
    %79 = vmatprep.subr.mxu0 0.0
    %80 = vmatpush1.msra.mxu0 0.0
    %81 = vmatprep.subr.mxu0 0.0
    %82 = vmatpush1.msra.mxu0 0.0
    %83 = vmatprep.subr.mxu0 0.0
    %84 = vmatpush1.msra.mxu0 0.0
    %85 = vmatprep.subr.mxu0 0.0
    %86 = vmatpush1.msra.mxu0 0.0
    %87 = vmatprep.subr.mxu0 0.0
    %88 = vmatpush1.msra.mxu0 0.0
    %89 = vmatprep.subr.mxu0 0.0
    %90 = vmatpush1.msra.mxu0 0.0
    %91 = vmatprep.subr.mxu0 0.0
    %92 = vmatpush1.msra.mxu0 0.0
    %93 = vmatprep.subr.mxu0 0.0
    %94 = vmatpush1.msra.mxu0 0.0
    %95 = vmatprep.subr.mxu0 0.0
    %96 = vmatpush1.msra.mxu0 0.0
    %97 = vmatprep.mubr.f32.mxu0 0.0
    %98 = vmatmul.mubr.f32.gmra.mrb[0].mxu0 %v31
    %v99 = vpop.f32.mrb[0].mxu0
    %v100 = vadd.f32 0.0, %v99
    %v101 = vpop.f32.mrb[0].mxu0
    %v102 = vadd.f32 0.0, %v101
    %103 = vdwg.mxu0
    %104 = vst [vmem:[#allocation2] sm:$0xff] %v100
    %105 = vst [vmem:[#allocation2 + $0x8] sm:$0xff] %v102
    // Predicated region
    $region10: #{forward.1} parent=1 // pred_check
      _
    $region11: #{forward.1} parent=1 // pred_check_branch
      %107 = sbr.rel (0) target = $region13
    $region12: #{forward.1} parent=1 // pred_region
      %s109 = ssub.s32 256, 256
      %110 = vsyncadd [#allocation3], %s109
      %s112 = sshll.u32 [#allocation2], 4
      %s113 = int_to_ptr.vmem [resolvable:$true] %s112
      %115 = dma.vmem_to_hbm [thread:$0]  %s113, 256, %s2, [#allocation3]
    $region13: #{forward.1} parent=1 // pred_fallthru
      _
    // Predicated region
    $region14: #{forward.1} parent=1 // pred_check
      _
    $region15: #{forward.1} parent=1 // pred_check_branch
      %117 = sbr.rel (0) target = $region17
    $region16: #{forward.1} parent=1 // pred_region
      %118 = dma.done [#allocation3], 256
    $region17: #{forward.1} parent=1 // pred_fallthru
      _
    %119 = vsyncpa [#allocation3], 1

</llo_original>
